<compile_context>
chip_gen: v6e
topology: v6e:2x2x1
jax: 0.10.0
libtpu: 0.0.40
codegen_flags: <defaults>
</compile_context>

<pallas_src>
import functools
import numpy as np

import jax
import jax.numpy as jnp
from jax import lax
from jax.experimental import pallas as pl
from jax.experimental.pallas import tpu as pltpu


# ----------------------------- Pallas kernel ------------------------------ #

def _mss_scale_kernel(fr_ref, cos_ref, sin_ref, out_ref, *, tm,
                      add_in_sqrt, log_eps, mag_weight, logmag_weight,
                      loss_type):
    """One grid step: (frame tile i, frequency tile k).

    fr_ref  : (2, tm, N)    stacked windowed frames (0 = target, 1 = value)
    cos_ref : (N, tkk)      real-DFT cos basis tile (Hann window folded in)
    sin_ref : (N, tkk)      real-DFT (-sin) basis tile
    out_ref : (1, 1, 8, 128) per-program partial sum (scalar at [0,0,0,0])
    """
    fr = fr_ref[...]
    n = fr.shape[-1]
    fr2 = fr.reshape(2 * tm, n)          # layout-trivial merge of leading dims

    c = cos_ref[...]
    s = sin_ref[...]

    # One MXU matmul per DFT component for BOTH signals (stacked LHS) — the
    # (N, tkk) RHS is pushed into the MXU weight registers half as often.
    re = jnp.dot(fr2, c, preferred_element_type=jnp.float32)
    im = jnp.dot(fr2, s, preferred_element_type=jnp.float32)
    mag = jnp.sqrt(re * re + im * im + add_in_sqrt)
    tmag = mag[:tm]
    vmag = mag[tm:]

    part = jnp.float32(0.0)
    if mag_weight > 0.0:
        d = tmag - vmag
        if loss_type == 'L1':
            part = part + mag_weight * jnp.sum(jnp.abs(d))
        else:  # 'L2'
            part = part + mag_weight * jnp.sum(d * d)
    if logmag_weight > 0.0:
        dl = jnp.log(tmag + log_eps) - jnp.log(vmag + log_eps)
        if loss_type == 'L1':
            part = part + logmag_weight * jnp.sum(jnp.abs(dl))
        else:  # 'L2'
            part = part + logmag_weight * jnp.sum(dl * dl)

    # Per-program partial: scalar placed at [0, 0] of an (8,128) block.
    sub = lax.broadcasted_iota(jnp.int32, (8, 128), 0)
    lane = lax.broadcasted_iota(jnp.int32, (8, 128), 1)
    out_ref[...] = jnp.where((sub == 0) & (lane == 0), part,
                             jnp.float32(0.0))[None, None]


# ------------------------------ glue (JAX) -------------------------------- #

def _vmem_limit_bytes():
    """Explicit scoped-VMEM limit: generous, but below physical capacity."""
    try:
        cap = int(pltpu.get_tpu_info().vmem_capacity_bytes)
        return int(min(100 * 1024 * 1024, (cap * 3) // 4))
    except Exception:
        return 64 * 1024 * 1024


def _dft_mats(size, kp):
    """Hann-windowed real-DFT matrices, freq padded with zeros up to kp."""
    n = np.arange(size)
    k = np.arange(size // 2 + 1)
    w = 0.5 - 0.5 * np.cos(2.0 * np.pi * n / size)          # periodic Hann
    ang = 2.0 * np.pi * np.outer(n, k) / size
    cos = (w[:, None] * np.cos(ang)).astype(np.float32)
    sin = (-w[:, None] * np.sin(ang)).astype(np.float32)
    cosp = np.zeros((size, kp), np.float32)
    sinp = np.zeros((size, kp), np.float32)
    cosp[:, :k.size] = cos
    sinp[:, :k.size] = sin
    return jnp.asarray(cosp), jnp.asarray(sinp)


def _frame_stacked(stacked, size, hop):
    """(2, B, T) -> (2, B*F, size) overlapping frames (no center padding)."""
    S, B, L = stacked.shape
    nf = 1 + (L - size) // hop
    idx = (jnp.arange(nf) * hop)[:, None] + jnp.arange(size)[None, :]
    frames = stacked[:, :, idx]                     # (2, B, nf, size)
    return frames.reshape(S, B * nf, size), nf


def _scale_loss_sum(frames, cos, sin, *, add_in_sqrt, log_eps,
                    mag_weight, logmag_weight, loss_type):
    """Weighted sum (not yet mean) of per-element differences, via Pallas."""
    _, M, N = frames.shape
    Kp = cos.shape[1]

    # Frame tile: big enough to fill the MXU M dimension (multiple of 8).
    tm = 256
    if M < tm:
        tm = max(8, ((M + 7) // 8) * 8)
    Mpad = ((M + tm - 1) // tm) * tm
    if Mpad != M:   # zero frames give identical mags for both signals -> 0 loss
        frames = jnp.pad(frames, ((0, 0), (0, Mpad - M), (0, 0)))

    # Frequency tile: largest multiple-of-128 divisor of Kp that is <= 512,
    # so the resident basis stays small even for fft_size = 2048.
    mlanes = Kp // 128
    dk = max(x for x in range(1, min(mlanes, 4) + 1) if mlanes % x == 0)
    tkk = 128 * dk

    nti = Mpad // tm
    ntk = Kp // tkk

    kernel = functools.partial(
        _mss_scale_kernel, tm=tm,
        add_in_sqrt=add_in_sqrt, log_eps=log_eps,
        mag_weight=mag_weight, logmag_weight=logmag_weight,
        loss_type=loss_type)

    partials = pl.pallas_call(
        kernel,
        out_shape=jax.ShapeDtypeStruct((nti, ntk, 8, 128), jnp.float32),
        grid_spec=pltpu.PrefetchScalarGridSpec(
            num_scalar_prefetch=0,
            grid=(nti, ntk),
            in_specs=[
                # frames stay resident across the (inner) frequency axis.
                pl.BlockSpec((2, tm, N), lambda i, k: (0, i, 0)),
                pl.BlockSpec((N, tkk), lambda i, k: (0, k)),
                pl.BlockSpec((N, tkk), lambda i, k: (0, k)),
            ],
            out_specs=pl.BlockSpec((1, 1, 8, 128), lambda i, k: (i, k, 0, 0)),
        ),
        compiler_params=pltpu.CompilerParams(
            dimension_semantics=("parallel", "arbitrary"),
            vmem_limit_bytes=_vmem_limit_bytes()),
    )(frames, cos, sin)
    return jnp.sum(partials)


class MSSLoss:
    """Multi-scale spectrogram loss (Pallas-backed forward)."""

    def __init__(self, fft_sizes=(2048, 1024, 512, 256, 128, 64),
                 loss_type='L1', mag_weight=0.0, logmag_weight=0.0,
                 add_in_sqrt=1e-10, log_eps=1e-7, matmul_dtype=jnp.float32):
        assert loss_type.upper() in ('L1', 'L2')
        self.fft_sizes = fft_sizes
        self.loss_type = loss_type.upper()
        self.mag_weight = float(mag_weight)
        self.logmag_weight = float(logmag_weight)
        self.add_in_sqrt = float(add_in_sqrt)
        self.log_eps = float(log_eps)
        # bf16 matmul inputs give ~2-3x MXU throughput on v6e/v7x but change
        # numerics; default stays f32 so results match the f32 reference.
        self.matmul_dtype = matmul_dtype

    def __call__(self, target_audio, audio):
        target_audio = jnp.asarray(target_audio, jnp.float32)
        audio = jnp.asarray(audio, jnp.float32)
        B = target_audio.shape[0]
        loss = jnp.float32(0.0)
        if self.mag_weight <= 0.0 and self.logmag_weight <= 0.0:
            return loss
        stacked = jnp.stack([target_audio, audio], axis=0)   # (2, B, T)
        cast = jnp.dtype(self.matmul_dtype) != jnp.dtype(jnp.float32)
        for size in self.fft_sizes:
            hop = size // 4
            K = size // 2 + 1
            Kp = ((K + 127) // 128) * 128
            cos, sin = _dft_mats(size, Kp)
            frames, nf = _frame_stacked(stacked, size, hop)
            if cast:
                frames = frames.astype(self.matmul_dtype)
                cos = cos.astype(self.matmul_dtype)
                sin = sin.astype(self.matmul_dtype)
            total = _scale_loss_sum(
                frames, cos, sin,
                add_in_sqrt=self.add_in_sqrt, log_eps=self.log_eps,
                mag_weight=self.mag_weight, logmag_weight=self.logmag_weight,
                loss_type=self.loss_type)
            count = B * nf * K  # torch.mean over the per-scale spectrogram
            loss = loss + total / jnp.float32(count)
        return loss


# --------------------------- pure-JAX reference --------------------------- #

def _ref_mss_loss(target_audio, audio, fft_sizes, loss_type, mag_weight,
                  logmag_weight, add_in_sqrt=1e-10, log_eps=1e-7):
    def frame(x, size, hop):
        B, L = x.shape
        nf = 1 + (L - size) // hop
        idx = (jnp.arange(nf) * hop)[:, None] + jnp.arange(size)[None, :]
        return x[:, idx].reshape(B * nf, size)

    loss = jnp.float32(0.0)
    for size in fft_sizes:
        hop = size // 4
        K = size // 2 + 1
        cos, sin = _dft_mats(size, K)  # unpadded
        tfrm = frame(jnp.asarray(target_audio, jnp.float32), size, hop)
        vfrm = frame(jnp.asarray(audio, jnp.float32), size, hop)

        def mag(fr):
            re = fr @ cos
            im = fr @ sin
            return jnp.sqrt(re * re + im * im + add_in_sqrt)

        tmag, vmag = mag(tfrm), mag(vfrm)
        if mag_weight > 0:
            d = tmag - vmag
            loss = loss + mag_weight * (jnp.mean(jnp.abs(d)) if loss_type == 'L1'
                                        else jnp.mean(d * d))
        if logmag_weight > 0:
            dl = jnp.log(tmag + log_eps) - jnp.log(vmag + log_eps)
            loss = loss + logmag_weight * (jnp.mean(jnp.abs(dl)) if loss_type == 'L1'
                                           else jnp.mean(dl * dl))
    return loss


# --------------------------------- main ------------------------------------ #

if __name__ == "__main__":
    key = jax.random.PRNGKey(0)
    k1, k2 = jax.random.split(key)
    B, T = 2, 1024
    target_audio = jax.random.normal(k1, (B, T), jnp.float32)
    audio = jax.random.normal(k2, (B, T), jnp.float32)

    fft_sizes = (256, 128, 64)   # small-scale version of the default ladder
    mss = MSSLoss(fft_sizes=fft_sizes, loss_type='L1',
                  mag_weight=1.0, logmag_weight=1.0)

    loss = mss(target_audio, audio)
    loss = jax.block_until_ready(loss)

    ref = _ref_mss_loss(target_audio, audio, fft_sizes, 'L1', 1.0, 1.0)
    ref = jax.block_until_ready(ref)

    assert np.isfinite(float(loss))
    np.testing.assert_allclose(float(loss), float(ref), rtol=1e-3, atol=1e-4)
    print("KERNEL_OK")
</pallas_src>

<mosaic_0001>
module attributes {stable_mosaic.version = 11 : i64} {
  func.func @_mss_scale_kernel(%arg0: i32, %arg1: i32, %arg2: memref<2x32x256xf32, #tpu.memory_space<vmem>>, %arg3: memref<256x256xf32, #tpu.memory_space<vmem>>, %arg4: memref<256x256xf32, #tpu.memory_space<vmem>>, %arg5: memref<1x1x8x128xf32, #tpu.memory_space<vmem>>) attributes {dimension_semantics = [#tpu.dimension_semantics<parallel>, #tpu.dimension_semantics<arbitrary>], iteration_bounds = array<i64: 1, 1>, scalar_prefetch = 0 : i64, scratch_operands = 0 : i64, tpu.core_type = #tpu.core_type<tc>, window_params = [{transform_indices = @transform_0, window_bounds = array<i64: 2, 32, 256>}, {transform_indices = @transform_1, window_bounds = array<i64: 256, 256>}, {transform_indices = @transform_2, window_bounds = array<i64: 256, 256>}, {transform_indices = @transform_3, window_bounds = array<i64: 1, 1, 8, 128>}]} {
    %c0 = arith.constant 0 : index
    %c0_0 = arith.constant 0 : index
    %c0_1 = arith.constant 0 : index
    %0 = vector.load %arg2[%c0, %c0_0, %c0_1] : memref<2x32x256xf32, #tpu.memory_space<vmem>>, vector<2x32x256xf32>
    %1 = vector.shape_cast %0 : vector<2x32x256xf32> to vector<64x256xf32>
    %c0_2 = arith.constant 0 : index
    %c0_3 = arith.constant 0 : index
    %2 = vector.load %arg3[%c0_2, %c0_3] : memref<256x256xf32, #tpu.memory_space<vmem>>, vector<256x256xf32>
    %c0_4 = arith.constant 0 : index
    %c0_5 = arith.constant 0 : index
    %3 = vector.load %arg4[%c0_4, %c0_5] : memref<256x256xf32, #tpu.memory_space<vmem>>, vector<256x256xf32>
    %cst = arith.constant dense<0.000000e+00> : vector<64x256xf32>
    %4 = tpu.matmul %1, %2, %cst {dimension_numbers = #tpu.dot_dimension_numbers<[1], [0], [0], [1], [0, 0, 1, 1], [], []>} : vector<64x256xf32>, vector<256x256xf32>, vector<64x256xf32> -> vector<64x256xf32>
    %cst_6 = arith.constant dense<0.000000e+00> : vector<64x256xf32>
    %5 = tpu.matmul %1, %3, %cst_6 {dimension_numbers = #tpu.dot_dimension_numbers<[1], [0], [0], [1], [0, 0, 1, 1], [], []>} : vector<64x256xf32>, vector<256x256xf32>, vector<64x256xf32> -> vector<64x256xf32>
    %6 = arith.mulf %4, %4 : vector<64x256xf32>
    %7 = arith.mulf %5, %5 : vector<64x256xf32>
    %8 = arith.addf %6, %7 : vector<64x256xf32>
    %cst_7 = arith.constant 1.000000e-10 : f32
    %9 = vector.broadcast %cst_7 : f32 to vector<64x256xf32>
    %10 = arith.addf %8, %9 : vector<64x256xf32>
    %11 = math.sqrt %10 : vector<64x256xf32>
    %12 = vector.extract_strided_slice %11 {offsets = [0, 0], sizes = [32, 256], strides = [1, 1]} : vector<64x256xf32> to vector<32x256xf32>
    %13 = vector.extract_strided_slice %11 {offsets = [32, 0], sizes = [32, 256], strides = [1, 1]} : vector<64x256xf32> to vector<32x256xf32>
    %14 = arith.subf %12, %13 : vector<32x256xf32>
    %15 = math.absf %14 : vector<32x256xf32>
    %16 = vector.shape_cast %15 : vector<32x256xf32> to vector<1x32x256xf32>
    %cst_8 = arith.constant dense<0.000000e+00> : vector<1xf32>
    %17 = vector.multi_reduction <add>, %16, %cst_8 [1, 2] : vector<1x32x256xf32> to vector<1xf32>
    %18 = vector.shape_cast %17 : vector<1xf32> to vector<1x1x1xf32>
    %19 = vector.extract %18[0, 0, 0] : f32 from vector<1x1x1xf32>
    %cst_9 = arith.constant 1.000000e+00 : f32
    %20 = arith.mulf %cst_9, %19 : f32
    %cst_10 = arith.constant 0.000000e+00 : f32
    %21 = arith.addf %cst_10, %20 : f32
    %cst_11 = arith.constant 1.000000e-07 : f32
    %22 = vector.broadcast %cst_11 : f32 to vector<32x256xf32>
    %23 = arith.addf %12, %22 : vector<32x256xf32>
    %24 = math.log %23 : vector<32x256xf32>
    %cst_12 = arith.constant 1.000000e-07 : f32
    %25 = vector.broadcast %cst_12 : f32 to vector<32x256xf32>
    %26 = arith.addf %13, %25 : vector<32x256xf32>
    %27 = math.log %26 : vector<32x256xf32>
    %28 = arith.subf %24, %27 : vector<32x256xf32>
    %29 = math.absf %28 : vector<32x256xf32>
    %30 = vector.shape_cast %29 : vector<32x256xf32> to vector<1x32x256xf32>
    %cst_13 = arith.constant dense<0.000000e+00> : vector<1xf32>
    %31 = vector.multi_reduction <add>, %30, %cst_13 [1, 2] : vector<1x32x256xf32> to vector<1xf32>
    %32 = vector.shape_cast %31 : vector<1xf32> to vector<1x1x1xf32>
    %33 = vector.extract %32[0, 0, 0] : f32 from vector<1x1x1xf32>
    %cst_14 = arith.constant 1.000000e+00 : f32
    %34 = arith.mulf %cst_14, %33 : f32
    %35 = arith.addf %21, %34 : f32
    %36 = tpu.iota {dimensions = array<i32: 0>} : vector<8x128xi32>
    %37 = tpu.iota {dimensions = array<i32: 1>} : vector<8x128xi32>
    %c0_i32 = arith.constant 0 : i32
    %38 = vector.broadcast %c0_i32 : i32 to vector<8x128xi32>
    %39 = arith.cmpi eq, %36, %38 : vector<8x128xi32>
    %c0_i32_15 = arith.constant 0 : i32
    %40 = vector.broadcast %c0_i32_15 : i32 to vector<8x128xi32>
    %41 = arith.cmpi eq, %37, %40 : vector<8x128xi32>
    %42 = arith.andi %39, %41 : vector<8x128xi1>
    %cst_16 = arith.constant 0.000000e+00 : f32
    %43 = vector.broadcast %35 : f32 to vector<8x128xf32>
    %44 = vector.broadcast %cst_16 : f32 to vector<8x128xf32>
    %45 = arith.select %42, %43, %44 : vector<8x128xi1>, vector<8x128xf32>
    %46 = vector.shape_cast %45 : vector<8x128xf32> to vector<1x1x8x128xf32>
    %c0_17 = arith.constant 0 : index
    %c0_18 = arith.constant 0 : index
    %c0_19 = arith.constant 0 : index
    %c0_20 = arith.constant 0 : index
    %47 = vector.load %arg5[%c0_17, %c0_18, %c0_19, %c0_20] : memref<1x1x8x128xf32, #tpu.memory_space<vmem>>, vector<1x1x8x128xf32>
    tpu.vector_store %arg5[%c0_17, %c0_18, %c0_19, %c0_20], %46 {strides = array<i32>} : memref<1x1x8x128xf32, #tpu.memory_space<vmem>>, vector<1x1x8x128xf32>,
    return
  }
  func.func @transform_0(%arg0: i32, %arg1: i32) -> (i32, i32, i32) {
    %c0_i32 = arith.constant 0 : i32
    %c0_i32_0 = arith.constant 0 : i32
    %c0_i32_1 = arith.constant 0 : i32
    return %c0_i32, %arg0, %c0_i32_0 : i32, i32, i32
  }
  func.func @transform_1(%arg0: i32, %arg1: i32) -> (i32, i32) {
    %c0_i32 = arith.constant 0 : i32
    %c0_i32_0 = arith.constant 0 : i32
    return %c0_i32, %arg1 : i32, i32
  }
  func.func @transform_2(%arg0: i32, %arg1: i32) -> (i32, i32) {
    %c0_i32 = arith.constant 0 : i32
    %c0_i32_0 = arith.constant 0 : i32
    return %c0_i32, %arg1 : i32, i32
  }
  func.func @transform_3(%arg0: i32, %arg1: i32) -> (i32, i32, i32, i32) {
    %c0_i32 = arith.constant 0 : i32
    %c0_i32_0 = arith.constant 0 : i32
    %c0_i32_1 = arith.constant 0 : i32
    return %arg0, %arg1, %c0_i32, %c0_i32_0 : i32, i32, i32, i32
  }
}

</mosaic_0001>

<llo_original>
// kernel: tpu_custom_call.1
$region0: #{tpu_custom_call.1}
  #allocation0 [shape = 'u32[]', space=smem, size = 0x4, offset = 0x4, fixed_abs, tag = 'smem constant byte address 0x4 - core index']
  #allocation1 [shape = 'u32[144,128]{1,0:T(1,128)}', space=vmem, size = 0x12000, scoped, tag = 'internal scratch']
  %s0 = inlined_call_operand.hbm [shape: f32[2,32,256], index: 0, kind: input, shape index: {}]
  %s1 = inlined_call_operand.hbm [shape: f32[256,256], index: 1, kind: input, shape index: {}]
  %s2 = inlined_call_operand.hbm [shape: f32[256,256], index: 2, kind: input, shape index: {}]
  %s3 = inlined_call_operand.hbm [shape: f32[1,1,8,128], index: 3, kind: output, shape index: {}]
  %s4 = sld [smem:[#allocation0]]
  $region34: #{tpu_custom_call.1} parent=0
    _
  %s6 = ssub.s32 1, %s4
  %s7 = scalar_select 0, %s6, %s4
  $region1: #{tpu_custom_call.1} parent=0
    #allocation2 [shape = 'u8[65536]{0}', space=vmem, size = 0x10000, scoped, tag = 'input window, operand 0, single buffered']
    #allocation3 [shape = 's32[1]{0}', space=sflag, size = 0x4, scoped, tag = 'scoped memory for tpu_custom_call.1']
    #allocation4 [shape = 's32[1]{0}', space=sflag, size = 0x4, scoped, tag = 'scoped memory for tpu_custom_call.1']
    #allocation5 [shape = 'u8[262144]{0}', space=vmem, size = 0x40000, scoped, tag = 'input window, operand 1, single buffered']
    #allocation6 [shape = 's32[1]{0}', space=sflag, size = 0x4, scoped, tag = 'scoped memory for tpu_custom_call.1']
    #allocation7 [shape = 'u8[262144]{0}', space=vmem, size = 0x40000, scoped, tag = 'input window, operand 2, single buffered']
    #allocation8 [shape = 'u8[4096]{0}', space=vmem, size = 0x1000, scoped, tag = 'output window, operand 0, single buffered']
    %8 = vsyncpa [#allocation3], 0
    %9 = vsyncpa [#allocation6], 0
    %10 = vsyncpa [#allocation4], 0
    // Predicated region
    $region2: #{tpu_custom_call.1} parent=1 // pred_check
      _
    $region3: #{tpu_custom_call.1} parent=1 // pred_check_branch
      %12 = sbr.rel (0) target = $region5
    $region4: #{tpu_custom_call.1} parent=1 // pred_region
      %s14 = ssub.s32 2048, 2048
      %15 = vsyncadd [#allocation3], %s14
      %s16 = sshll.u32 [#allocation2], 4
      %s17 = int_to_ptr.vmem [resolvable:$true] %s16
      %22 = dma.hbm_to_vmem [thread:$0]  %s0, 2048, %s17, [#allocation3], 256, 256, 16
    $region5: #{tpu_custom_call.1} parent=1 // pred_fallthru
      _
    // Predicated region
    $region6: #{tpu_custom_call.1} parent=1 // pred_check
      _
    $region7: #{tpu_custom_call.1} parent=1 // pred_check_branch
      %24 = sbr.rel (0) target = $region9
    $region8: #{tpu_custom_call.1} parent=1 // pred_region
      %s26 = ssub.s32 8192, 8192
      %27 = vsyncadd [#allocation6], %s26
      %s28 = sshll.u32 [#allocation5], 4
      %s29 = int_to_ptr.vmem [resolvable:$true] %s28
      %34 = dma.hbm_to_vmem [thread:$0]  %s1, 8192, %s29, [#allocation6], 256, 256, 16
    $region9: #{tpu_custom_call.1} parent=1 // pred_fallthru
      _
    // Predicated region
    $region10: #{tpu_custom_call.1} parent=1 // pred_check
      _
    $region11: #{tpu_custom_call.1} parent=1 // pred_check_branch
      %36 = sbr.rel (0) target = $region13
    $region12: #{tpu_custom_call.1} parent=1 // pred_region
      %s38 = ssub.s32 8192, 8192
      %39 = vsyncadd [#allocation6], %s38
      %s40 = sshll.u32 [#allocation7], 4
      %s41 = int_to_ptr.vmem [resolvable:$true] %s40
      %46 = dma.hbm_to_vmem [thread:$0]  %s2, 8192, %s41, [#allocation6], 256, 256, 16
    $region13: #{tpu_custom_call.1} parent=1 // pred_fallthru
      _
    // Predicated region
    $region14: #{tpu_custom_call.1} parent=1 // pred_check
      _
    $region15: #{tpu_custom_call.1} parent=1 // pred_check_branch
      %48 = sbr.rel (0) target = $region17
    $region16: #{tpu_custom_call.1} parent=1 // pred_region
      %49 = dma.done [#allocation3], 2048
    $region17: #{tpu_custom_call.1} parent=1 // pred_fallthru
      _
    // Predicated region
    $region18: #{tpu_custom_call.1} parent=1 // pred_check
      _
    $region19: #{tpu_custom_call.1} parent=1 // pred_check_branch
      %51 = sbr.rel (0) target = $region21
    $region20: #{tpu_custom_call.1} parent=1 // pred_region
      %52 = dma.done [#allocation6], 8192
    $region21: #{tpu_custom_call.1} parent=1 // pred_fallthru
      _
    // Predicated region
    $region22: #{tpu_custom_call.1} parent=1 // pred_check
      _
    $region23: #{tpu_custom_call.1} parent=1 // pred_check_branch
      %54 = sbr.rel (0) target = $region25
    $region24: #{tpu_custom_call.1} parent=1 // pred_region
      %55 = dma.done [#allocation6], 8192
    $region25: #{tpu_custom_call.1} parent=1 // pred_fallthru
      _
    %v56 = vld [vmem:[#allocation2] sm:$0xff]
    %v57 = vld [vmem:[#allocation2 + $0x8] sm:$0xff]
    %v58 = vld [vmem:[#allocation2 + $0x10] sm:$0xff]
    %v59 = vld [vmem:[#allocation2 + $0x18] sm:$0xff]
    %v60 = vld [vmem:[#allocation2 + $0x20] sm:$0xff]
    %v61 = vld [vmem:[#allocation2 + $0x28] sm:$0xff]
    %v62 = vld [vmem:[#allocation2 + $0x30] sm:$0xff]
    %v63 = vld [vmem:[#allocation2 + $0x38] sm:$0xff]
    %v64 = vld [vmem:[#allocation2 + $0x40] sm:$0xff]
    %v65 = vld [vmem:[#allocation2 + $0x48] sm:$0xff]
    %v66 = vld [vmem:[#allocation2 + $0x50] sm:$0xff]
    %v67 = vld [vmem:[#allocation2 + $0x58] sm:$0xff]
    %v68 = vld [vmem:[#allocation2 + $0x60] sm:$0xff]
    %v69 = vld [vmem:[#allocation2 + $0x68] sm:$0xff]
    %v70 = vld [vmem:[#allocation2 + $0x70] sm:$0xff]
    %v71 = vld [vmem:[#allocation2 + $0x78] sm:$0xff]
    %v72 = vld [vmem:[#allocation5] sm:$0xff]
    %v73 = vld [vmem:[#allocation5 + $0x8] sm:$0xff]
    %v74 = vld [vmem:[#allocation5 + $0x10] sm:$0xff]
    %v75 = vld [vmem:[#allocation5 + $0x18] sm:$0xff]
    %v76 = vld [vmem:[#allocation5 + $0x20] sm:$0xff]
    %v77 = vld [vmem:[#allocation5 + $0x28] sm:$0xff]
    %v78 = vld [vmem:[#allocation5 + $0x30] sm:$0xff]
    %v79 = vld [vmem:[#allocation5 + $0x38] sm:$0xff]
    %v80 = vld [vmem:[#allocation5 + $0x40] sm:$0xff]
    %v81 = vld [vmem:[#allocation5 + $0x48] sm:$0xff]
    %v82 = vld [vmem:[#allocation5 + $0x50] sm:$0xff]
    %v83 = vld [vmem:[#allocation5 + $0x58] sm:$0xff]
    %v84 = vld [vmem:[#allocation5 + $0x60] sm:$0xff]
    %v85 = vld [vmem:[#allocation5 + $0x68] sm:$0xff]
    %v86 = vld [vmem:[#allocation5 + $0x70] sm:$0xff]
    %v87 = vld [vmem:[#allocation5 + $0x78] sm:$0xff]
    %v88 = vld [vmem:[#allocation5 + $0x80] sm:$0xff]
    %v89 = vld [vmem:[#allocation5 + $0x88] sm:$0xff]
    %v90 = vld [vmem:[#allocation5 + $0x90] sm:$0xff]
    %v91 = vld [vmem:[#allocation5 + $0x98] sm:$0xff]
    %v92 = vld [vmem:[#allocation5 + $0xa0] sm:$0xff]
    %v93 = vld [vmem:[#allocation5 + $0xa8] sm:$0xff]
    %v94 = vld [vmem:[#allocation5 + $0xb0] sm:$0xff]
    %v95 = vld [vmem:[#allocation5 + $0xb8] sm:$0xff]
    %v96 = vld [vmem:[#allocation5 + $0xc0] sm:$0xff]
    %v97 = vld [vmem:[#allocation5 + $0xc8] sm:$0xff]
    %v98 = vld [vmem:[#allocation5 + $0xd0] sm:$0xff]
    %v99 = vld [vmem:[#allocation5 + $0xd8] sm:$0xff]
    %v100 = vld [vmem:[#allocation5 + $0xe0] sm:$0xff]
    %v101 = vld [vmem:[#allocation5 + $0xe8] sm:$0xff]
    %v102 = vld [vmem:[#allocation5 + $0xf0] sm:$0xff]
    %v103 = vld [vmem:[#allocation5 + $0xf8] sm:$0xff]
    %v104 = vld [vmem:[#allocation5 + $0x100] sm:$0xff]
    %v105 = vld [vmem:[#allocation5 + $0x108] sm:$0xff]
    %v106 = vld [vmem:[#allocation5 + $0x110] sm:$0xff]
    %v107 = vld [vmem:[#allocation5 + $0x118] sm:$0xff]
    %v108 = vld [vmem:[#allocation5 + $0x120] sm:$0xff]
    %v109 = vld [vmem:[#allocation5 + $0x128] sm:$0xff]
    %v110 = vld [vmem:[#allocation5 + $0x130] sm:$0xff]
    %v111 = vld [vmem:[#allocation5 + $0x138] sm:$0xff]
    %v112 = vld [vmem:[#allocation5 + $0x140] sm:$0xff]
    %v113 = vld [vmem:[#allocation5 + $0x148] sm:$0xff]
    %v114 = vld [vmem:[#allocation5 + $0x150] sm:$0xff]
    %v115 = vld [vmem:[#allocation5 + $0x158] sm:$0xff]
    %v116 = vld [vmem:[#allocation5 + $0x160] sm:$0xff]
    %v117 = vld [vmem:[#allocation5 + $0x168] sm:$0xff]
    %v118 = vld [vmem:[#allocation5 + $0x170] sm:$0xff]
    %v119 = vld [vmem:[#allocation5 + $0x178] sm:$0xff]
    %v120 = vld [vmem:[#allocation5 + $0x180] sm:$0xff]
    %v121 = vld [vmem:[#allocation5 + $0x188] sm:$0xff]
    %v122 = vld [vmem:[#allocation5 + $0x190] sm:$0xff]
    %v123 = vld [vmem:[#allocation5 + $0x198] sm:$0xff]
    %v124 = vld [vmem:[#allocation5 + $0x1a0] sm:$0xff]
    %v125 = vld [vmem:[#allocation5 + $0x1a8] sm:$0xff]
    %v126 = vld [vmem:[#allocation5 + $0x1b0] sm:$0xff]
    %v127 = vld [vmem:[#allocation5 + $0x1b8] sm:$0xff]
    %v128 = vld [vmem:[#allocation5 + $0x1c0] sm:$0xff]
    %v129 = vld [vmem:[#allocation5 + $0x1c8] sm:$0xff]
    %v130 = vld [vmem:[#allocation5 + $0x1d0] sm:$0xff]
    %v131 = vld [vmem:[#allocation5 + $0x1d8] sm:$0xff]
    %v132 = vld [vmem:[#allocation5 + $0x1e0] sm:$0xff]
    %v133 = vld [vmem:[#allocation5 + $0x1e8] sm:$0xff]
    %v134 = vld [vmem:[#allocation5 + $0x1f0] sm:$0xff]
    %v135 = vld [vmem:[#allocation5 + $0x1f8] sm:$0xff]
    %v136 = vld [vmem:[#allocation7] sm:$0xff]
    %v137 = vld [vmem:[#allocation7 + $0x8] sm:$0xff]
    %v138 = vld [vmem:[#allocation7 + $0x10] sm:$0xff]
    %v139 = vld [vmem:[#allocation7 + $0x18] sm:$0xff]
    %v140 = vld [vmem:[#allocation7 + $0x20] sm:$0xff]
    %v141 = vld [vmem:[#allocation7 + $0x28] sm:$0xff]
    %v142 = vld [vmem:[#allocation7 + $0x30] sm:$0xff]
    %v143 = vld [vmem:[#allocation7 + $0x38] sm:$0xff]
    %v144 = vld [vmem:[#allocation7 + $0x40] sm:$0xff]
    %v145 = vld [vmem:[#allocation7 + $0x48] sm:$0xff]
    %v146 = vld [vmem:[#allocation7 + $0x50] sm:$0xff]
    %v147 = vld [vmem:[#allocation7 + $0x58] sm:$0xff]
    %v148 = vld [vmem:[#allocation7 + $0x60] sm:$0xff]
    %v149 = vld [vmem:[#allocation7 + $0x68] sm:$0xff]
    %v150 = vld [vmem:[#allocation7 + $0x70] sm:$0xff]
    %v151 = vld [vmem:[#allocation7 + $0x78] sm:$0xff]
    %v152 = vld [vmem:[#allocation7 + $0x80] sm:$0xff]
    %v153 = vld [vmem:[#allocation7 + $0x88] sm:$0xff]
    %v154 = vld [vmem:[#allocation7 + $0x90] sm:$0xff]
    %v155 = vld [vmem:[#allocation7 + $0x98] sm:$0xff]
    %v156 = vld [vmem:[#allocation7 + $0xa0] sm:$0xff]
    %v157 = vld [vmem:[#allocation7 + $0xa8] sm:$0xff]
    %v158 = vld [vmem:[#allocation7 + $0xb0] sm:$0xff]
    %v159 = vld [vmem:[#allocation7 + $0xb8] sm:$0xff]
    %v160 = vld [vmem:[#allocation7 + $0xc0] sm:$0xff]
    %v161 = vld [vmem:[#allocation7 + $0xc8] sm:$0xff]
    %v162 = vld [vmem:[#allocation7 + $0xd0] sm:$0xff]
    %v163 = vld [vmem:[#allocation7 + $0xd8] sm:$0xff]
    %v164 = vld [vmem:[#allocation7 + $0xe0] sm:$0xff]
    %v165 = vld [vmem:[#allocation7 + $0xe8] sm:$0xff]
    %v166 = vld [vmem:[#allocation7 + $0xf0] sm:$0xff]
    %v167 = vld [vmem:[#allocation7 + $0xf8] sm:$0xff]
    %v168 = vld [vmem:[#allocation7 + $0x100] sm:$0xff]
    %v169 = vld [vmem:[#allocation7 + $0x108] sm:$0xff]
    %v170 = vld [vmem:[#allocation7 + $0x110] sm:$0xff]
    %v171 = vld [vmem:[#allocation7 + $0x118] sm:$0xff]
    %v172 = vld [vmem:[#allocation7 + $0x120] sm:$0xff]
    %v173 = vld [vmem:[#allocation7 + $0x128] sm:$0xff]
    %v174 = vld [vmem:[#allocation7 + $0x130] sm:$0xff]
    %v175 = vld [vmem:[#allocation7 + $0x138] sm:$0xff]
    %v176 = vld [vmem:[#allocation7 + $0x140] sm:$0xff]
    %v177 = vld [vmem:[#allocation7 + $0x148] sm:$0xff]
    %v178 = vld [vmem:[#allocation7 + $0x150] sm:$0xff]
    %v179 = vld [vmem:[#allocation7 + $0x158] sm:$0xff]
    %v180 = vld [vmem:[#allocation7 + $0x160] sm:$0xff]
    %v181 = vld [vmem:[#allocation7 + $0x168] sm:$0xff]
    %v182 = vld [vmem:[#allocation7 + $0x170] sm:$0xff]
    %v183 = vld [vmem:[#allocation7 + $0x178] sm:$0xff]
    %v184 = vld [vmem:[#allocation7 + $0x180] sm:$0xff]
    %v185 = vld [vmem:[#allocation7 + $0x188] sm:$0xff]
    %v186 = vld [vmem:[#allocation7 + $0x190] sm:$0xff]
    %v187 = vld [vmem:[#allocation7 + $0x198] sm:$0xff]
    %v188 = vld [vmem:[#allocation7 + $0x1a0] sm:$0xff]
    %v189 = vld [vmem:[#allocation7 + $0x1a8] sm:$0xff]
    %v190 = vld [vmem:[#allocation7 + $0x1b0] sm:$0xff]
    %v191 = vld [vmem:[#allocation7 + $0x1b8] sm:$0xff]
    %v192 = vld [vmem:[#allocation7 + $0x1c0] sm:$0xff]
    %v193 = vld [vmem:[#allocation7 + $0x1c8] sm:$0xff]
    %v194 = vld [vmem:[#allocation7 + $0x1d0] sm:$0xff]
    %v195 = vld [vmem:[#allocation7 + $0x1d8] sm:$0xff]
    %v196 = vld [vmem:[#allocation7 + $0x1e0] sm:$0xff]
    %v197 = vld [vmem:[#allocation7 + $0x1e8] sm:$0xff]
    %v198 = vld [vmem:[#allocation7 + $0x1f0] sm:$0xff]
    %v199 = vld [vmem:[#allocation7 + $0x1f8] sm:$0xff]
    %200 = vmatprep.subr.mxu0 %v103
    %201 = vmatpush1.msra.mxu0 %v102
    %202 = vmatprep.subr.mxu0 %v101
    %203 = vmatpush1.msra.mxu0 %v100
    %204 = vmatprep.subr.mxu0 %v99
    %205 = vmatpush1.msra.mxu0 %v98
    %206 = vmatprep.subr.mxu0 %v97
    %207 = vmatpush1.msra.mxu0 %v96
    %208 = vmatprep.subr.mxu0 %v95
    %209 = vmatpush1.msra.mxu0 %v94
    %210 = vmatprep.subr.mxu0 %v93
    %211 = vmatpush1.msra.mxu0 %v92
    %212 = vmatprep.subr.mxu0 %v91
    %213 = vmatpush1.msra.mxu0 %v90
    %214 = vmatprep.subr.mxu0 %v89
    %215 = vmatpush1.msra.mxu0 %v88
    %216 = vmatprep.subr.mxu0 %v87
    %217 = vmatpush1.msra.mxu0 %v86
    %218 = vmatprep.subr.mxu0 %v85
    %219 = vmatpush1.msra.mxu0 %v84
    %220 = vmatprep.subr.mxu0 %v83
    %221 = vmatpush1.msra.mxu0 %v82
    %222 = vmatprep.subr.mxu0 %v81
    %223 = vmatpush1.msra.mxu0 %v80
    %224 = vmatprep.subr.mxu0 %v79
    %225 = vmatpush1.msra.mxu0 %v78
    %226 = vmatprep.subr.mxu0 %v77
    %227 = vmatpush1.msra.mxu0 %v76
    %228 = vmatprep.subr.mxu0 %v75
    %229 = vmatpush1.msra.mxu0 %v74
    %230 = vmatprep.subr.mxu0 %v73
    %231 = vmatpush1.msra.mxu0 %v72
    %232 = vmatprep.subr.mxu0 %v135
    %233 = vmatpush2.msra.mxu0 %v134
    %234 = vmatprep.subr.mxu0 %v133
    %235 = vmatpush2.msra.mxu0 %v132
    %236 = vmatprep.subr.mxu0 %v131
    %237 = vmatpush2.msra.mxu0 %v130
    %238 = vmatprep.subr.mxu0 %v129
    %239 = vmatpush2.msra.mxu0 %v128
    %240 = vmatprep.subr.mxu0 %v127
    %241 = vmatpush2.msra.mxu0 %v126
    %242 = vmatprep.subr.mxu0 %v125
    %243 = vmatpush2.msra.mxu0 %v124
    %244 = vmatprep.subr.mxu0 %v123
    %245 = vmatpush2.msra.mxu0 %v122
    %246 = vmatprep.subr.mxu0 %v121
    %247 = vmatpush2.msra.mxu0 %v120
    %248 = vmatprep.subr.mxu0 %v119
    %249 = vmatpush2.msra.mxu0 %v118
    %250 = vmatprep.subr.mxu0 %v117
    %251 = vmatpush2.msra.mxu0 %v116
    %252 = vmatprep.subr.mxu0 %v115
    %253 = vmatpush2.msra.mxu0 %v114
    %254 = vmatprep.subr.mxu0 %v113
    %255 = vmatpush2.msra.mxu0 %v112
    %256 = vmatprep.subr.mxu0 %v111
    %257 = vmatpush2.msra.mxu0 %v110
    %258 = vmatprep.subr.mxu0 %v109
    %259 = vmatpush2.msra.mxu0 %v108
    %260 = vmatprep.subr.mxu0 %v107
    %261 = vmatpush2.msra.mxu0 %v106
    %262 = vmatprep.subr.mxu0 %v105
    %263 = vmatpush2.msra.mxu0 %v104
    %264 = vmatprep.mubr.f32.mxu0 %v57
    %265 = vmatmul.mubr.f32.gmra.mxu0 %v56
    %v266 = vpop.f32.mrf.mxu0
    %v267 = vadd.f32 0.0, %v266
    %v268 = vpop.f32.mrf.mxu0
    %v269 = vadd.f32 0.0, %v268
    %270 = vmatprep.mubr.f32.mxu0 %v59
    %271 = vmatmul.mubr.f32.gmra.mxu0 %v58
    %v272 = vpop.f32.mrf.mxu0
    %v273 = vadd.f32 0.0, %v272
    %v274 = vpop.f32.mrf.mxu0
    %v275 = vadd.f32 0.0, %v274
    %276 = vmatprep.mubr.f32.mxu0 %v61
    %277 = vmatmul.mubr.f32.gmra.mxu0 %v60
    %v278 = vpop.f32.mrf.mxu0
    %v279 = vadd.f32 0.0, %v278
    %v280 = vpop.f32.mrf.mxu0
    %v281 = vadd.f32 0.0, %v280
    %282 = vmatprep.mubr.f32.mxu0 %v63
    %283 = vmatmul.mubr.f32.gmra.mxu0 %v62
    %v284 = vpop.f32.mrf.mxu0
    %v285 = vadd.f32 0.0, %v284
    %v286 = vpop.f32.mrf.mxu0
    %v287 = vadd.f32 0.0, %v286
    %288 = vmatprep.mubr.f32.mxu0 %v65
    %289 = vmatmul.mubr.f32.gmra.mxu0 %v64
    %v290 = vpop.f32.mrf.mxu0
    %v291 = vadd.f32 0.0, %v290
    %v292 = vpop.f32.mrf.mxu0
    %v293 = vadd.f32 0.0, %v292
    %294 = vmatprep.mubr.f32.mxu0 %v67
    %295 = vmatmul.mubr.f32.gmra.mxu0 %v66
    %v296 = vpop.f32.mrf.mxu0
    %v297 = vadd.f32 0.0, %v296
    %v298 = vpop.f32.mrf.mxu0
    %v299 = vadd.f32 0.0, %v298
    %300 = vmatprep.mubr.f32.mxu0 %v69
    %301 = vmatmul.mubr.f32.gmra.mxu0 %v68
    %v302 = vpop.f32.mrf.mxu0
    %v303 = vadd.f32 0.0, %v302
    %v304 = vpop.f32.mrf.mxu0
    %v305 = vadd.f32 0.0, %v304
    %306 = vmatprep.mubr.f32.mxu0 %v71
    %307 = vmatmul.mubr.f32.gmra.mxu0 %v70
    %v308 = vpop.f32.mrf.mxu0
    %v309 = vadd.f32 0.0, %v308
    %v310 = vpop.f32.mrf.mxu0
    %v311 = vadd.f32 0.0, %v310
    %312 = vdwg.mxu0
    %313 = vmatprep.subr.mxu0 %v167
    %314 = vmatpush1.msra.mxu0 %v166
    %315 = vmatprep.subr.mxu0 %v165
    %316 = vmatpush1.msra.mxu0 %v164
    %317 = vmatprep.subr.mxu0 %v163
    %318 = vmatpush1.msra.mxu0 %v162
    %319 = vmatprep.subr.mxu0 %v161
    %320 = vmatpush1.msra.mxu0 %v160
    %321 = vmatprep.subr.mxu0 %v159
    %322 = vmatpush1.msra.mxu0 %v158
    %323 = vmatprep.subr.mxu0 %v157
    %324 = vmatpush1.msra.mxu0 %v156
    %325 = vmatprep.subr.mxu0 %v155
    %326 = vmatpush1.msra.mxu0 %v154
    %327 = vmatprep.subr.mxu0 %v153
    %328 = vmatpush1.msra.mxu0 %v152
    %329 = vmatprep.subr.mxu0 %v151
    %330 = vmatpush1.msra.mxu0 %v150
    %331 = vmatprep.subr.mxu0 %v149
    %332 = vmatpush1.msra.mxu0 %v148
    %333 = vmatprep.subr.mxu0 %v147
    %334 = vmatpush1.msra.mxu0 %v146
    %335 = vmatprep.subr.mxu0 %v145
    %336 = vmatpush1.msra.mxu0 %v144
    %337 = vmatprep.subr.mxu0 %v143
    %338 = vmatpush1.msra.mxu0 %v142
    %339 = vmatprep.subr.mxu0 %v141
    %340 = vmatpush1.msra.mxu0 %v140
    %341 = vmatprep.subr.mxu0 %v139
    %342 = vmatpush1.msra.mxu0 %v138
    %343 = vmatprep.subr.mxu0 %v137
    %344 = vmatpush1.msra.mxu0 %v136
    %345 = vmatprep.subr.mxu0 %v199
    %346 = vmatpush2.msra.mxu0 %v198
    %347 = vmatprep.subr.mxu0 %v197
    %348 = vmatpush2.msra.mxu0 %v196
    %349 = vmatprep.subr.mxu0 %v195
    %350 = vmatpush2.msra.mxu0 %v194
    %351 = vmatprep.subr.mxu0 %v193
    %352 = vmatpush2.msra.mxu0 %v192
    %353 = vmatprep.subr.mxu0 %v191
    %354 = vmatpush2.msra.mxu0 %v190
    %355 = vmatprep.subr.mxu0 %v189
    %356 = vmatpush2.msra.mxu0 %v188
    %357 = vmatprep.subr.mxu0 %v187
    %358 = vmatpush2.msra.mxu0 %v186
    %359 = vmatprep.subr.mxu0 %v185
    %360 = vmatpush2.msra.mxu0 %v184
    %361 = vmatprep.subr.mxu0 %v183
    %362 = vmatpush2.msra.mxu0 %v182
    %363 = vmatprep.subr.mxu0 %v181
    %364 = vmatpush2.msra.mxu0 %v180
    %365 = vmatprep.subr.mxu0 %v179
    %366 = vmatpush2.msra.mxu0 %v178
    %367 = vmatprep.subr.mxu0 %v177
    %368 = vmatpush2.msra.mxu0 %v176
    %369 = vmatprep.subr.mxu0 %v175
    %370 = vmatpush2.msra.mxu0 %v174
    %371 = vmatprep.subr.mxu0 %v173
    %372 = vmatpush2.msra.mxu0 %v172
    %373 = vmatprep.subr.mxu0 %v171
    %374 = vmatpush2.msra.mxu0 %v170
    %375 = vmatprep.subr.mxu0 %v169
    %376 = vmatpush2.msra.mxu0 %v168
    %377 = vmatprep.mubr.f32.mxu0 %v57
    %378 = vmatmul.mubr.f32.gmra.mxu0 %v56
    %v379 = vpop.f32.mrf.mxu0
    %v380 = vadd.f32 0.0, %v379
    %v381 = vpop.f32.mrf.mxu0
    %v382 = vadd.f32 0.0, %v381
    %383 = vmatprep.mubr.f32.mxu0 %v59
    %384 = vmatmul.mubr.f32.gmra.mxu0 %v58
    %v385 = vpop.f32.mrf.mxu0
    %v386 = vadd.f32 0.0, %v385
    %v387 = vpop.f32.mrf.mxu0
    %v388 = vadd.f32 0.0, %v387
    %389 = vmatprep.mubr.f32.mxu0 %v61
    %390 = vmatmul.mubr.f32.gmra.mxu0 %v60
    %v391 = vpop.f32.mrf.mxu0
    %v392 = vadd.f32 0.0, %v391
    %v393 = vpop.f32.mrf.mxu0
    %v394 = vadd.f32 0.0, %v393
    %395 = vmatprep.mubr.f32.mxu0 %v63
    %396 = vmatmul.mubr.f32.gmra.mxu0 %v62
    %v397 = vpop.f32.mrf.mxu0
    %v398 = vadd.f32 0.0, %v397
    %v399 = vpop.f32.mrf.mxu0
    %v400 = vadd.f32 0.0, %v399
    %401 = vmatprep.mubr.f32.mxu0 %v65
    %402 = vmatmul.mubr.f32.gmra.mxu0 %v64
    %v403 = vpop.f32.mrf.mxu0
    %v404 = vadd.f32 0.0, %v403
    %v405 = vpop.f32.mrf.mxu0
    %v406 = vadd.f32 0.0, %v405
    %407 = vmatprep.mubr.f32.mxu0 %v67
    %408 = vmatmul.mubr.f32.gmra.mxu0 %v66
    %v409 = vpop.f32.mrf.mxu0
    %v410 = vadd.f32 0.0, %v409
    %v411 = vpop.f32.mrf.mxu0
    %v412 = vadd.f32 0.0, %v411
    %413 = vmatprep.mubr.f32.mxu0 %v69
    %414 = vmatmul.mubr.f32.gmra.mxu0 %v68
    %v415 = vpop.f32.mrf.mxu0
    %v416 = vadd.f32 0.0, %v415
    %v417 = vpop.f32.mrf.mxu0
    %v418 = vadd.f32 0.0, %v417
    %419 = vmatprep.mubr.f32.mxu0 %v71
    %420 = vmatmul.mubr.f32.gmra.mxu0 %v70
    %v421 = vpop.f32.mrf.mxu0
    %v422 = vadd.f32 0.0, %v421
    %v423 = vpop.f32.mrf.mxu0
    %v424 = vadd.f32 0.0, %v423
    %425 = vdwg.mxu0
    %v426 = vmul.f32 %v267, %v267
    %v427 = vmul.f32 %v269, %v269
    %v428 = vmul.f32 %v273, %v273
    %v429 = vmul.f32 %v275, %v275
    %v430 = vmul.f32 %v279, %v279
    %v431 = vmul.f32 %v281, %v281
    %v432 = vmul.f32 %v285, %v285
    %v433 = vmul.f32 %v287, %v287
    %v434 = vmul.f32 %v291, %v291
    %v435 = vmul.f32 %v293, %v293
    %v436 = vmul.f32 %v297, %v297
    %v437 = vmul.f32 %v299, %v299
    %v438 = vmul.f32 %v303, %v303
    %v439 = vmul.f32 %v305, %v305
    %v440 = vmul.f32 %v309, %v309
    %v441 = vmul.f32 %v311, %v311
    %v442 = vmul.f32 %v380, %v380
    %v443 = vmul.f32 %v382, %v382
    %v444 = vmul.f32 %v386, %v386
    %v445 = vmul.f32 %v388, %v388
    %v446 = vmul.f32 %v392, %v392
    %v447 = vmul.f32 %v394, %v394
    %v448 = vmul.f32 %v398, %v398
    %v449 = vmul.f32 %v400, %v400
    %v450 = vmul.f32 %v404, %v404
    %v451 = vmul.f32 %v406, %v406
    %v452 = vmul.f32 %v410, %v410
    %v453 = vmul.f32 %v412, %v412
    %v454 = vmul.f32 %v416, %v416
    %v455 = vmul.f32 %v418, %v418
    %v456 = vmul.f32 %v422, %v422
    %v457 = vmul.f32 %v424, %v424
    %v458 = vadd.f32 %v426, %v442
    %v459 = vadd.f32 %v427, %v443
    %v460 = vadd.f32 %v428, %v444
    %v461 = vadd.f32 %v429, %v445
    %v462 = vadd.f32 %v430, %v446
    %v463 = vadd.f32 %v431, %v447
    %v464 = vadd.f32 %v432, %v448
    %v465 = vadd.f32 %v433, %v449
    %v466 = vadd.f32 %v434, %v450
    %v467 = vadd.f32 %v435, %v451
    %v468 = vadd.f32 %v436, %v452
    %v469 = vadd.f32 %v437, %v453
    %v470 = vadd.f32 %v438, %v454
    %v471 = vadd.f32 %v439, %v455
    %v472 = vadd.f32 %v440, %v456
    %v473 = vadd.f32 %v441, %v457
    %v474 = vadd.f32 %v458, 1e-10
    %v475 = vadd.f32 %v459, 1e-10
    %v476 = vadd.f32 %v460, 1e-10
    %v477 = vadd.f32 %v461, 1e-10
    %v478 = vadd.f32 %v462, 1e-10
    %v479 = vadd.f32 %v463, 1e-10
    %v480 = vadd.f32 %v464, 1e-10
    %v481 = vadd.f32 %v465, 1e-10
    %v482 = vadd.f32 %v466, 1e-10
    %v483 = vadd.f32 %v467, 1e-10
    %v484 = vadd.f32 %v468, 1e-10
    %v485 = vadd.f32 %v469, 1e-10
    %v486 = vadd.f32 %v470, 1e-10
    %v487 = vadd.f32 %v471, 1e-10
    %v488 = vadd.f32 %v472, 1e-10
    %v489 = vadd.f32 %v473, 1e-10
    %v490 = vrsqrt.pop %v474
    %v491 = vmul.f32 %v474, %v490
    %vm492 = vcmp.eq.f32.partialorder %v474, inf
    %v493 = vsel %vm492, %v474, %v491
    %vm494 = vcmp.eq.f32.partialorder %v474, 0.0
    %v495 = vand.u32 %v474, 2147483648
    %v496 = vsel %vm494, %v495, %v493
    %v497 = vrsqrt.pop %v475
    %v498 = vmul.f32 %v475, %v497
    %vm499 = vcmp.eq.f32.partialorder %v475, inf
    %v500 = vsel %vm499, %v475, %v498
    %vm501 = vcmp.eq.f32.partialorder %v475, 0.0
    %v502 = vand.u32 %v475, 2147483648
    %v503 = vsel %vm501, %v502, %v500
    %v504 = vrsqrt.pop %v476
    %v505 = vmul.f32 %v476, %v504
    %vm506 = vcmp.eq.f32.partialorder %v476, inf
    %v507 = vsel %vm506, %v476, %v505
    %vm508 = vcmp.eq.f32.partialorder %v476, 0.0
    %v509 = vand.u32 %v476, 2147483648
    %v510 = vsel %vm508, %v509, %v507
    %v511 = vrsqrt.pop %v477
    %v512 = vmul.f32 %v477, %v511
    %vm513 = vcmp.eq.f32.partialorder %v477, inf
    %v514 = vsel %vm513, %v477, %v512
    %vm515 = vcmp.eq.f32.partialorder %v477, 0.0
    %v516 = vand.u32 %v477, 2147483648
    %v517 = vsel %vm515, %v516, %v514
    %v518 = vrsqrt.pop %v478
    %v519 = vmul.f32 %v478, %v518
    %vm520 = vcmp.eq.f32.partialorder %v478, inf
    %v521 = vsel %vm520, %v478, %v519
    %vm522 = vcmp.eq.f32.partialorder %v478, 0.0
    %v523 = vand.u32 %v478, 2147483648
    %v524 = vsel %vm522, %v523, %v521
    %v525 = vrsqrt.pop %v479
    %v526 = vmul.f32 %v479, %v525
    %vm527 = vcmp.eq.f32.partialorder %v479, inf
    %v528 = vsel %vm527, %v479, %v526
    %vm529 = vcmp.eq.f32.partialorder %v479, 0.0
    %v530 = vand.u32 %v479, 2147483648
    %v531 = vsel %vm529, %v530, %v528
    %v532 = vrsqrt.pop %v480
    %v533 = vmul.f32 %v480, %v532
    %vm534 = vcmp.eq.f32.partialorder %v480, inf
    %v535 = vsel %vm534, %v480, %v533
    %vm536 = vcmp.eq.f32.partialorder %v480, 0.0
    %v537 = vand.u32 %v480, 2147483648
    %v538 = vsel %vm536, %v537, %v535
    %v539 = vrsqrt.pop %v481
    %v540 = vmul.f32 %v481, %v539
    %vm541 = vcmp.eq.f32.partialorder %v481, inf
    %v542 = vsel %vm541, %v481, %v540
    %vm543 = vcmp.eq.f32.partialorder %v481, 0.0
    %v544 = vand.u32 %v481, 2147483648
    %v545 = vsel %vm543, %v544, %v542
    %v546 = vrsqrt.pop %v482
    %v547 = vmul.f32 %v482, %v546
    %vm548 = vcmp.eq.f32.partialorder %v482, inf
    %v549 = vsel %vm548, %v482, %v547
    %vm550 = vcmp.eq.f32.partialorder %v482, 0.0
    %v551 = vand.u32 %v482, 2147483648
    %v552 = vsel %vm550, %v551, %v549
    %v553 = vrsqrt.pop %v483
    %v554 = vmul.f32 %v483, %v553
    %vm555 = vcmp.eq.f32.partialorder %v483, inf
    %v556 = vsel %vm555, %v483, %v554
    %vm557 = vcmp.eq.f32.partialorder %v483, 0.0
    %v558 = vand.u32 %v483, 2147483648
    %v559 = vsel %vm557, %v558, %v556
    %v560 = vrsqrt.pop %v484
    %v561 = vmul.f32 %v484, %v560
    %vm562 = vcmp.eq.f32.partialorder %v484, inf
    %v563 = vsel %vm562, %v484, %v561
    %vm564 = vcmp.eq.f32.partialorder %v484, 0.0
    %v565 = vand.u32 %v484, 2147483648
    %v566 = vsel %vm564, %v565, %v563
    %v567 = vrsqrt.pop %v485
    %v568 = vmul.f32 %v485, %v567
    %vm569 = vcmp.eq.f32.partialorder %v485, inf
    %v570 = vsel %vm569, %v485, %v568
    %vm571 = vcmp.eq.f32.partialorder %v485, 0.0
    %v572 = vand.u32 %v485, 2147483648
    %v573 = vsel %vm571, %v572, %v570
    %v574 = vrsqrt.pop %v486
    %v575 = vmul.f32 %v486, %v574
    %vm576 = vcmp.eq.f32.partialorder %v486, inf
    %v577 = vsel %vm576, %v486, %v575
    %vm578 = vcmp.eq.f32.partialorder %v486, 0.0
    %v579 = vand.u32 %v486, 2147483648
    %v580 = vsel %vm578, %v579, %v577
    %v581 = vrsqrt.pop %v487
    %v582 = vmul.f32 %v487, %v581
    %vm583 = vcmp.eq.f32.partialorder %v487, inf
    %v584 = vsel %vm583, %v487, %v582
    %vm585 = vcmp.eq.f32.partialorder %v487, 0.0
    %v586 = vand.u32 %v487, 2147483648
    %v587 = vsel %vm585, %v586, %v584
    %v588 = vrsqrt.pop %v488
    %v589 = vmul.f32 %v488, %v588
    %vm590 = vcmp.eq.f32.partialorder %v488, inf
    %v591 = vsel %vm590, %v488, %v589
    %vm592 = vcmp.eq.f32.partialorder %v488, 0.0
    %v593 = vand.u32 %v488, 2147483648
    %v594 = vsel %vm592, %v593, %v591
    %v595 = vrsqrt.pop %v489
    %v596 = vmul.f32 %v489, %v595
    %vm597 = vcmp.eq.f32.partialorder %v489, inf
    %v598 = vsel %vm597, %v489, %v596
    %vm599 = vcmp.eq.f32.partialorder %v489, 0.0
    %v600 = vand.u32 %v489, 2147483648
    %v601 = vsel %vm599, %v600, %v598
    %v602 = vsub.f32 %v496, %v552
    %v603 = vsub.f32 %v503, %v559
    %v604 = vsub.f32 %v510, %v566
    %v605 = vsub.f32 %v517, %v573
    %v606 = vsub.f32 %v524, %v580
    %v607 = vsub.f32 %v531, %v587
    %v608 = vsub.f32 %v538, %v594
    %v609 = vsub.f32 %v545, %v601
    %v610 = vand.u32 2147483647, %v602
    %v611 = vand.u32 2147483647, %v603
    %v612 = vand.u32 2147483647, %v604
    %v613 = vand.u32 2147483647, %v605
    %v614 = vand.u32 2147483647, %v606
    %v615 = vand.u32 2147483647, %v607
    %v616 = vand.u32 2147483647, %v608
    %v617 = vand.u32 2147483647, %v609
    %v618 = vadd.f32 %v610, %v611
    %v619 = vadd.f32 %v618, %v612
    %v620 = vadd.f32 %v619, %v613
    %v621 = vadd.f32 %v620, %v614
    %v622 = vadd.f32 %v621, %v615
    %v623 = vadd.f32 %v622, %v616
    %v624 = vadd.f32 %v623, %v617
    %625 = vadd.xlane.f32.xlu0 %v624
    %v626 = vpop.xlane.xlu0 %625
    %v627 = vrot.slane %v626, 4
    %v628 = vadd.f32 %v626, %v627
    %v629 = vrot.slane %v628, 2
    %v630 = vadd.f32 %v628, %v629
    %v631 = vrot.slane %v630, 1
    %v632 = vadd.f32 %v630, %v631
    %s633 = vtos %v632
    %s634 = sadd.f32 %s633, 0.0
    %v635 = vadd.f32 %v496, 1e-07
    %v636 = vadd.f32 %v503, 1e-07
    %v637 = vadd.f32 %v510, 1e-07
    %v638 = vadd.f32 %v517, 1e-07
    %v639 = vadd.f32 %v524, 1e-07
    %v640 = vadd.f32 %v531, 1e-07
    %v641 = vadd.f32 %v538, 1e-07
    %v642 = vadd.f32 %v545, 1e-07
    %v643 = vlog2.pop %v635
    %v644 = vmul.f32 %v643, 0.6931472
    %v645 = vlog2.pop %v636
    %v646 = vmul.f32 %v645, 0.6931472
    %v647 = vlog2.pop %v637
    %v648 = vmul.f32 %v647, 0.6931472
    %v649 = vlog2.pop %v638
    %v650 = vmul.f32 %v649, 0.6931472
    %v651 = vlog2.pop %v639
    %v652 = vmul.f32 %v651, 0.6931472
    %v653 = vlog2.pop %v640
    %v654 = vmul.f32 %v653, 0.6931472
    %v655 = vlog2.pop %v641
    %v656 = vmul.f32 %v655, 0.6931472
    %v657 = vlog2.pop %v642
    %v658 = vmul.f32 %v657, 0.6931472
    %v659 = vadd.f32 %v552, 1e-07
    %v660 = vadd.f32 %v559, 1e-07
    %v661 = vadd.f32 %v566, 1e-07
    %v662 = vadd.f32 %v573, 1e-07
    %v663 = vadd.f32 %v580, 1e-07
    %v664 = vadd.f32 %v587, 1e-07
    %v665 = vadd.f32 %v594, 1e-07
    %v666 = vadd.f32 %v601, 1e-07
    %v667 = vlog2.pop %v659
    %v668 = vmul.f32 %v667, 0.6931472
    %v669 = vlog2.pop %v660
    %v670 = vmul.f32 %v669, 0.6931472
    %v671 = vlog2.pop %v661
    %v672 = vmul.f32 %v671, 0.6931472
    %v673 = vlog2.pop %v662
    %v674 = vmul.f32 %v673, 0.6931472
    %v675 = vlog2.pop %v663
    %v676 = vmul.f32 %v675, 0.6931472
    %v677 = vlog2.pop %v664
    %v678 = vmul.f32 %v677, 0.6931472
    %v679 = vlog2.pop %v665
    %v680 = vmul.f32 %v679, 0.6931472
    %v681 = vlog2.pop %v666
    %v682 = vmul.f32 %v681, 0.6931472
    %v683 = vsub.f32 %v644, %v668
    %v684 = vsub.f32 %v646, %v670
    %v685 = vsub.f32 %v648, %v672
    %v686 = vsub.f32 %v650, %v674
    %v687 = vsub.f32 %v652, %v676
    %v688 = vsub.f32 %v654, %v678
    %v689 = vsub.f32 %v656, %v680
    %v690 = vsub.f32 %v658, %v682
    %v691 = vand.u32 2147483647, %v683
    %v692 = vand.u32 2147483647, %v684
    %v693 = vand.u32 2147483647, %v685
    %v694 = vand.u32 2147483647, %v686
    %v695 = vand.u32 2147483647, %v687
    %v696 = vand.u32 2147483647, %v688
    %v697 = vand.u32 2147483647, %v689
    %v698 = vand.u32 2147483647, %v690
    %v699 = vadd.f32 %v691, %v692
    %v700 = vadd.f32 %v699, %v693
    %v701 = vadd.f32 %v700, %v694
    %v702 = vadd.f32 %v701, %v695
    %v703 = vadd.f32 %v702, %v696
    %v704 = vadd.f32 %v703, %v697
    %v705 = vadd.f32 %v704, %v698
    %706 = vadd.xlane.f32.xlu0 %v705
    %v707 = vpop.xlane.xlu0 %706
    %v708 = vrot.slane %v707, 4
    %v709 = vadd.f32 %v707, %v708
    %v710 = vrot.slane %v709, 2
    %v711 = vadd.f32 %v709, %v710
    %v712 = vrot.slane %v711, 1
    %v713 = vadd.f32 %v711, %v712
    %s714 = vtos %v713
    %s715 = sadd.f32 %s634, %s714
    %v716 = vlaneseq
    %v717 = vshrl.u32 %v716, 7
    %v718 = vlaneseq
    %v719 = vand.u32 %v718, 127
    %vm720 = vcmp.eq.s32.totalorder %v717, 0
    %vm721 = vcmp.eq.s32.totalorder %v719, 0
    %vm722 = vmand %vm720, %vm721
    %v723 = vstv %s715
    %v724 = vsel %vm722, %v723, 0.0
    %725 = vst [vmem:[#allocation8] sm:$0xff] %v724
    // Predicated region
    $region26: #{tpu_custom_call.1} parent=1 // pred_check
      _
    $region27: #{tpu_custom_call.1} parent=1 // pred_check_branch
      %727 = sbr.rel (0) target = $region29
    $region28: #{tpu_custom_call.1} parent=1 // pred_region
      %s729 = ssub.s32 128, 128
      %730 = vsyncadd [#allocation4], %s729
      %s732 = sshll.u32 [#allocation8], 4
      %s733 = int_to_ptr.vmem [resolvable:$true] %s732
      %735 = dma.vmem_to_hbm [thread:$0]  %s733, 128, %s3, [#allocation4]
    $region29: #{tpu_custom_call.1} parent=1 // pred_fallthru
      _
    // Predicated region
    $region30: #{tpu_custom_call.1} parent=1 // pred_check
      _
    $region31: #{tpu_custom_call.1} parent=1 // pred_check_branch
      %737 = sbr.rel (0) target = $region33
    $region32: #{tpu_custom_call.1} parent=1 // pred_region
      %738 = dma.done [#allocation4], 128
    $region33: #{tpu_custom_call.1} parent=1 // pred_fallthru
      _
    %739 = vsyncpa [#allocation3], 1
    %740 = vsyncpa [#allocation6], 1
    %741 = vsyncpa [#allocation4], 1

</llo_original>
